<compile_context>
chip_gen: v5e
topology: v5e:2x2
jax: 0.10.0
libtpu: 0.0.40
codegen_flags: <defaults>
</compile_context>

<pallas_src>
import functools

import jax
import jax.numpy as jnp
from jax.experimental import pallas as pl
from jax.experimental.pallas import tpu as pltpu


# ---------------------------------------------------------------------------- kernel
def combined_kernel(x_ref, wd_ref, bd_ref, wu_ref, bu_ref, wh_ref, bh_ref,
                    out_ref, y1_ref, *, matmul_dtype):
    """grid = (batch tiles i, head-column tiles j).

    j == 0: run the adapter (bottleneck + residual) for this batch tile and cache
    y1 in VMEM scratch. Every j: one head-column matmul against the cached y1.
    MXU operands are fed in `matmul_dtype` (bf16 fast path); accumulation, bias
    adds and the residual stay in f32.
    """

    @pl.when(pl.program_id(1) == 0)
    def _adapter():
        x = x_ref[...]                                             # f32 activations
        h = jnp.dot(x.astype(matmul_dtype), wd_ref[...],
                    preferred_element_type=jnp.float32) + bd_ref[...]
        h = jnp.maximum(h, 0.0)                                    # ReLU
        y1 = jnp.dot(h.astype(matmul_dtype), wu_ref[...],
                     preferred_element_type=jnp.float32) + bu_ref[...] + x
        y1_ref[...] = y1

    y2 = jnp.dot(y1_ref[...].astype(matmul_dtype), wh_ref[...],
                 preferred_element_type=jnp.float32) + bh_ref[...]
    out_ref[...] = y2.astype(out_ref.dtype)


# ---------------------------------------------------------------------------- helpers
def _round_up(n, m):
    return ((n + m - 1) // m) * m


def _cdiv(a, b):
    return (a + b - 1) // b


def _pad2(a, rows, cols):
    return jnp.pad(a, ((0, rows - a.shape[0]), (0, cols - a.shape[1])))


def _spec(shape, index_map, buffers=None):
    """BlockSpec, optionally with an explicit pipeline buffer count."""
    if buffers is not None and hasattr(pl, "Buffered"):
        return pl.BlockSpec(shape, index_map, pipeline_mode=pl.Buffered(buffers))
    return pl.BlockSpec(shape, index_map)


def _choose_batch_tile(b8, max_tile=512):
    """Sublane-aligned batch tile: <=8 rows of padding waste, >=2 grid tiles for
    moderate/large batches (so both v7x TensorCores get work), tiles big enough to
    amortize the ~0.35us per-grid-step overhead."""
    if b8 <= 64:                       # tiny batch: one tile, zero extra waste
        return b8
    n_tiles = max(2, _cdiv(b8, max_tile))
    return _round_up(_cdiv(b8, n_tiles), 8)


# ---------------------------------------------------------------------------- params prep (hoisted out of the forward path)
def prepare_params(params, *, matmul_dtype=jnp.bfloat16, lane=128, head_tile=512):
    """Pad + cast the weights ONCE (not per forward call).

    D / bottleneck / C are zero-padded to multiples of 128 (lane-dense, exact-zero
    contributions). The head is further padded to a multiple of the head column
    tile `head_tile` so it can be streamed in (D_p, TC) slabs along a second grid
    axis. Weights are stored in `matmul_dtype` (bf16 fast MXU path or f32 exact);
    biases stay f32.
    """
    wd, bd, wu, bu, wh, bh = params
    D, Bn = wd.shape
    C = wh.shape[1]
    D_p, Bn_p, C_p = _round_up(D, lane), _round_up(Bn, lane), _round_up(C, lane)
    TC = C_p if C_p <= head_tile else head_tile
    C_pad = _round_up(C_p, TC)
    f32 = jnp.float32
    return dict(
        wd=_pad2(wd.astype(f32), D_p, Bn_p).astype(matmul_dtype),
        bd=_pad2(bd.astype(f32), 1, Bn_p),
        wu=_pad2(wu.astype(f32), Bn_p, D_p).astype(matmul_dtype),
        bu=_pad2(bu.astype(f32), 1, D_p),
        wh=_pad2(wh.astype(f32), D_p, C_pad).astype(matmul_dtype),
        bh=_pad2(bh.astype(f32), 1, C_pad),
        dims=(D, C, D_p, Bn_p, C_pad, TC),
        matmul_dtype=matmul_dtype,
    )


# ---------------------------------------------------------------------------- forward
def combined_forward(x, prep, *, max_batch_tile=512):
    """Fused adapter + head forward. x: [B, D]; prep from prepare_params()."""
    x = x.astype(jnp.float32)                      # mirrors x.to(torch.float32)
    B = x.shape[0]
    D, C, D_p, Bn_p, C_pad, TC = prep["dims"]
    assert x.shape[1] == D, f"expected feature dim {D}, got {x.shape[1]}"

    TB = _choose_batch_tile(_round_up(B, 8), max_batch_tile)
    B_pad = _round_up(B, TB)
    n_b, n_c = B_pad // TB, C_pad // TC
    x_p = _pad2(x, B_pad, D_p)                     # padded rows/cols sliced off below

    mdt = prep["matmul_dtype"]
    wsz = jnp.dtype(mdt).itemsize

    # Explicit scoped-VMEM limit (defaults are only 16 MiB on v5e / 32 MiB on v6e,v7x).
    head_bufs = 1 if n_c == 1 else 2
    vmem_need = (
        2 * D_p * Bn_p * wsz + (Bn_p + D_p) * 4            # resident adapter weights (1 buf) + biases
        + head_bufs * (D_p * TC * wsz + TC * 4)            # head weight/bias slabs
        + 2 * TB * D_p * 4 + 2 * TB * TC * 4               # double-buffered x / out tiles
        + TB * D_p * 4                                     # y1 scratch
        + TB * (Bn_p + 2 * D_p + TC) * 4                   # live in-kernel intermediates
    )
    vmem_limit = max(32 << 20, min(int(vmem_need * 1.25) + (4 << 20), 128 << 20))

    head_rereads = n_b if n_c > 1 else 1
    cost = pl.CostEstimate(
        flops=4 * B_pad * D_p * Bn_p + 2 * B_pad * D_p * C_pad,
        transcendentals=0,
        bytes_accessed=(B_pad * D_p * 4 + B_pad * C_pad * 4
                        + 2 * D_p * Bn_p * wsz + (Bn_p + D_p) * 4
                        + head_rereads * (D_p * C_pad * wsz + C_pad * 4)),
    )

    resident = lambda i, j: (0, 0)                 # constant block -> stays in VMEM
    head_bufs_spec = 1 if n_c == 1 else None       # re-streamed when split -> default 2-deep

    out_p = pl.pallas_call(
        functools.partial(combined_kernel, matmul_dtype=mdt),
        out_shape=jax.ShapeDtypeStruct((B_pad, C_pad), jnp.float32),
        grid=(n_b, n_c),
        in_specs=[
            pl.BlockSpec((TB, D_p), lambda i, j: (i, 0)),               # x, streamed per batch tile
            _spec((D_p, Bn_p), resident, buffers=1),                    # W_down (resident, 1 buffer)
            _spec((1, Bn_p), resident, buffers=1),                      # b_down
            _spec((Bn_p, D_p), resident, buffers=1),                    # W_up
            _spec((1, D_p), resident, buffers=1),                       # b_up
            _spec((D_p, TC), lambda i, j: (0, j), buffers=head_bufs_spec),  # W_head column slab
            _spec((1, TC), lambda i, j: (0, j), buffers=head_bufs_spec),    # b_head column slab
        ],
        out_specs=pl.BlockSpec((TB, TC), lambda i, j: (i, j)),
        scratch_shapes=[pltpu.VMEM((TB, D_p), jnp.float32)],            # y1 cached across head tiles
        compiler_params=pltpu.CompilerParams(
            dimension_semantics=("parallel", "arbitrary"),              # batch tiles shard across v7x TCs
            vmem_limit_bytes=vmem_limit,
        ),
        cost_estimate=cost,
    )(x_p, prep["wd"], prep["bd"], prep["wu"], prep["bu"], prep["wh"], prep["bh"])

    return out_p[:B, :C]


# ---------------------------------------------------------------------------- reference & init
def reference_forward(x, params):
    wd, bd, wu, bu, wh, bh = params
    x = x.astype(jnp.float32)
    hp = jax.lax.Precision.HIGHEST
    h = jnp.maximum(jnp.dot(x, wd, precision=hp) + bd, 0.0)
    y1 = jnp.dot(h, wu, precision=hp) + bu + x
    return jnp.dot(y1, wh, precision=hp) + bh


def init_params(key, d_in, bottleneck, d_out):
    k1, k2, k3, k4, k5, k6 = jax.random.split(key, 6)
    wd = jax.random.normal(k1, (d_in, bottleneck), jnp.float32) * 0.1
    bd = jax.random.normal(k2, (1, bottleneck), jnp.float32) * 0.01
    wu = jax.random.normal(k3, (bottleneck, d_in), jnp.float32) * 0.1
    bu = jax.random.normal(k4, (1, d_in), jnp.float32) * 0.01
    wh = jax.random.normal(k5, (d_in, d_out), jnp.float32) * 0.1
    bh = jax.random.normal(k6, (1, d_out), jnp.float32) * 0.01
    return (wd, bd, wu, bu, wh, bh)


if __name__ == "__main__":
    key = jax.random.PRNGKey(0)
    # (B, D, bottleneck, C): a tiny smoke shape, plus one that exercises multiple
    # batch tiles and the split-head (second) grid axis with its pl.when guard.
    configs = [(4, 32, 8, 16), (100, 160, 24, 600)]

    for idx, (B, D, BN, C) in enumerate(configs):
        kx, kp = jax.random.split(jax.random.fold_in(key, idx))
        x = jax.random.normal(kx, (B, D), jnp.float32)
        params = init_params(kp, D, BN, C)
        ref = reference_forward(x, params)

        # f32 MXU feed: matches the float32 torch reference tightly.
        prep32 = prepare_params(params, matmul_dtype=jnp.float32)
        out32 = jax.block_until_ready(combined_forward(x, prep32))
        assert out32.shape == (B, C), f"bad shape {out32.shape}"
        assert jnp.allclose(out32, ref, atol=5e-4, rtol=5e-4), "f32 path mismatch vs reference"

        # bf16 MXU feed (fast path): gate on drift tolerance before adopting.
        prep16 = prepare_params(params, matmul_dtype=jnp.bfloat16)
        out16 = jax.block_until_ready(combined_forward(x, prep16))
        assert out16.shape == (B, C), f"bad shape {out16.shape}"
        assert jnp.allclose(out16, ref, atol=1e-1, rtol=2e-2), "bf16 drift exceeds gate vs f32 reference"

    print("KERNEL_OK")
</pallas_src>

<mosaic_0001>
module attributes {stable_mosaic.version = 11 : i64} {
  func.func @combined_kernel(%arg0: i32, %arg1: i32, %arg2: memref<8x128xf32, #tpu.memory_space<vmem>>, %arg3: memref<128x128xf32, #tpu.memory_space<vmem>>, %arg4: memref<1x128xf32, #tpu.memory_space<vmem>>, %arg5: memref<128x128xf32, #tpu.memory_space<vmem>>, %arg6: memref<1x128xf32, #tpu.memory_space<vmem>>, %arg7: memref<128x128xf32, #tpu.memory_space<vmem>>, %arg8: memref<1x128xf32, #tpu.memory_space<vmem>>, %arg9: memref<8x128xf32, #tpu.memory_space<vmem>>, %arg10: memref<8x128xf32, #tpu.memory_space<vmem>>) attributes {dimension_semantics = [#tpu.dimension_semantics<parallel>, #tpu.dimension_semantics<arbitrary>], iteration_bounds = array<i64: 1, 1>, scalar_prefetch = 0 : i64, scratch_operands = 1 : i64, tpu.core_type = #tpu.core_type<tc>, window_params = [{transform_indices = @transform_0, window_bounds = array<i64: 8, 128>}, {pipeline_mode = #tpu.pipeline_mode<synchronous>, transform_indices = @transform_1, window_bounds = array<i64: 128, 128>}, {pipeline_mode = #tpu.pipeline_mode<synchronous>, transform_indices = @transform_2, window_bounds = array<i64: 1, 128>}, {pipeline_mode = #tpu.pipeline_mode<synchronous>, transform_indices = @transform_3, window_bounds = array<i64: 128, 128>}, {pipeline_mode = #tpu.pipeline_mode<synchronous>, transform_indices = @transform_4, window_bounds = array<i64: 1, 128>}, {pipeline_mode = #tpu.pipeline_mode<synchronous>, transform_indices = @transform_5, window_bounds = array<i64: 128, 128>}, {pipeline_mode = #tpu.pipeline_mode<synchronous>, transform_indices = @transform_6, window_bounds = array<i64: 1, 128>}, {transform_indices = @transform_7, window_bounds = array<i64: 8, 128>}]} {
    %c0_i32 = arith.constant 0 : i32
    %0 = arith.cmpi eq, %arg1, %c0_i32 : i32
    %1 = arith.extui %0 : i1 to i32
    %c0_i32_0 = arith.constant 0 : i32
    %2 = arith.cmpi ne, %1, %c0_i32_0 : i32
    scf.if %2 {
      %c0_8 = arith.constant 0 : index
      %c0_9 = arith.constant 0 : index
      %10 = vector.load %arg2[%c0_8, %c0_9] : memref<8x128xf32, #tpu.memory_space<vmem>>, vector<8x128xf32>
      %c0_10 = arith.constant 0 : index
      %c0_11 = arith.constant 0 : index
      %11 = vector.load %arg3[%c0_10, %c0_11] : memref<128x128xf32, #tpu.memory_space<vmem>>, vector<128x128xf32>
      %cst_12 = arith.constant dense<0.000000e+00> : vector<8x128xf32>
      %12 = tpu.matmul %10, %11, %cst_12 {dimension_numbers = #tpu.dot_dimension_numbers<[1], [0], [0], [1], [0, 0, 1, 1], [], []>} : vector<8x128xf32>, vector<128x128xf32>, vector<8x128xf32> -> vector<8x128xf32>
      %c0_13 = arith.constant 0 : index
      %c0_14 = arith.constant 0 : index
      %13 = vector.load %arg4[%c0_13, %c0_14] : memref<1x128xf32, #tpu.memory_space<vmem>>, vector<1x128xf32>
      %14 = vector.broadcast %13 : vector<1x128xf32> to vector<8x128xf32>
      %15 = arith.addf %12, %14 : vector<8x128xf32>
      %cst_15 = arith.constant 0.000000e+00 : f32
      %16 = vector.broadcast %cst_15 : f32 to vector<8x128xf32>
      %17 = arith.maximumf %15, %16 : vector<8x128xf32>
      %c0_16 = arith.constant 0 : index
      %c0_17 = arith.constant 0 : index
      %18 = vector.load %arg5[%c0_16, %c0_17] : memref<128x128xf32, #tpu.memory_space<vmem>>, vector<128x128xf32>
      %cst_18 = arith.constant dense<0.000000e+00> : vector<8x128xf32>
      %19 = tpu.matmul %17, %18, %cst_18 {dimension_numbers = #tpu.dot_dimension_numbers<[1], [0], [0], [1], [0, 0, 1, 1], [], []>} : vector<8x128xf32>, vector<128x128xf32>, vector<8x128xf32> -> vector<8x128xf32>
      %c0_19 = arith.constant 0 : index
      %c0_20 = arith.constant 0 : index
      %20 = vector.load %arg6[%c0_19, %c0_20] : memref<1x128xf32, #tpu.memory_space<vmem>>, vector<1x128xf32>
      %21 = vector.broadcast %20 : vector<1x128xf32> to vector<8x128xf32>
      %22 = arith.addf %19, %21 : vector<8x128xf32>
      %23 = arith.addf %22, %10 : vector<8x128xf32>
      %c0_21 = arith.constant 0 : index
      %c0_22 = arith.constant 0 : index
      %24 = vector.load %arg10[%c0_21, %c0_22] : memref<8x128xf32, #tpu.memory_space<vmem>>, vector<8x128xf32>
      tpu.vector_store %arg10[%c0_21, %c0_22], %23 {strides = array<i32>} : memref<8x128xf32, #tpu.memory_space<vmem>>, vector<8x128xf32>,
    } else {
    }
    %c0 = arith.constant 0 : index
    %c0_1 = arith.constant 0 : index
    %3 = vector.load %arg10[%c0, %c0_1] : memref<8x128xf32, #tpu.memory_space<vmem>>, vector<8x128xf32>
    %c0_2 = arith.constant 0 : index
    %c0_3 = arith.constant 0 : index
    %4 = vector.load %arg7[%c0_2, %c0_3] : memref<128x128xf32, #tpu.memory_space<vmem>>, vector<128x128xf32>
    %cst = arith.constant dense<0.000000e+00> : vector<8x128xf32>
    %5 = tpu.matmul %3, %4, %cst {dimension_numbers = #tpu.dot_dimension_numbers<[1], [0], [0], [1], [0, 0, 1, 1], [], []>} : vector<8x128xf32>, vector<128x128xf32>, vector<8x128xf32> -> vector<8x128xf32>
    %c0_4 = arith.constant 0 : index
    %c0_5 = arith.constant 0 : index
    %6 = vector.load %arg8[%c0_4, %c0_5] : memref<1x128xf32, #tpu.memory_space<vmem>>, vector<1x128xf32>
    %7 = vector.broadcast %6 : vector<1x128xf32> to vector<8x128xf32>
    %8 = arith.addf %5, %7 : vector<8x128xf32>
    %c0_6 = arith.constant 0 : index
    %c0_7 = arith.constant 0 : index
    %9 = vector.load %arg9[%c0_6, %c0_7] : memref<8x128xf32, #tpu.memory_space<vmem>>, vector<8x128xf32>
    tpu.vector_store %arg9[%c0_6, %c0_7], %8 {strides = array<i32>} : memref<8x128xf32, #tpu.memory_space<vmem>>, vector<8x128xf32>,
    return
  }
  func.func @transform_0(%arg0: i32, %arg1: i32) -> (i32, i32) {
    %c0_i32 = arith.constant 0 : i32
    %c0_i32_0 = arith.constant 0 : i32
    return %arg0, %c0_i32 : i32, i32
  }
  func.func @transform_1(%arg0: i32, %arg1: i32) -> (i32, i32) {
    %c0_i32 = arith.constant 0 : i32
    %c0_i32_0 = arith.constant 0 : i32
    %c0_i32_1 = arith.constant 0 : i32
    return %c0_i32, %c0_i32_0 : i32, i32
  }
  func.func @transform_2(%arg0: i32, %arg1: i32) -> (i32, i32) {
    %c0_i32 = arith.constant 0 : i32
    %c0_i32_0 = arith.constant 0 : i32
    %c0_i32_1 = arith.constant 0 : i32
    return %c0_i32, %c0_i32_0 : i32, i32
  }
  func.func @transform_3(%arg0: i32, %arg1: i32) -> (i32, i32) {
    %c0_i32 = arith.constant 0 : i32
    %c0_i32_0 = arith.constant 0 : i32
    %c0_i32_1 = arith.constant 0 : i32
    return %c0_i32, %c0_i32_0 : i32, i32
  }
  func.func @transform_4(%arg0: i32, %arg1: i32) -> (i32, i32) {
    %c0_i32 = arith.constant 0 : i32
    %c0_i32_0 = arith.constant 0 : i32
    %c0_i32_1 = arith.constant 0 : i32
    return %c0_i32, %c0_i32_0 : i32, i32
  }
  func.func @transform_5(%arg0: i32, %arg1: i32) -> (i32, i32) {
    %c0_i32 = arith.constant 0 : i32
    %c0_i32_0 = arith.constant 0 : i32
    return %c0_i32, %arg1 : i32, i32
  }
  func.func @transform_6(%arg0: i32, %arg1: i32) -> (i32, i32) {
    %c0_i32 = arith.constant 0 : i32
    %c0_i32_0 = arith.constant 0 : i32
    return %c0_i32, %arg1 : i32, i32
  }
  func.func @transform_7(%arg0: i32, %arg1: i32) -> (i32, i32) {
    %c0_i32 = arith.constant 0 : i32
    return %arg0, %arg1 : i32, i32
  }
}

</mosaic_0001>

<llo_original>
// kernel: tpu_custom_call.1
$region0: #{tpu_custom_call.1}
  #allocation0 [shape = 'u32[]', space=smem, size = 0x4, offset = 0x4, fixed_abs, tag = 'smem constant byte address 0x4 - core index']
  #allocation1 [shape = 'u32[72,128]{1,0:T(1,128)}', space=vmem, size = 0x9000, scoped, tag = 'internal scratch']
  #allocation2 [shape = 'f32[8,128]{1,0:T(8,128)}', space=vmem, size = 0x1000, scoped, tag = 'scratch operand']
  %s0 = inlined_call_operand.hbm [shape: f32[8,128], index: 0, kind: input, shape index: {}]
  %s1 = inlined_call_operand.hbm [shape: f32[128,128], index: 1, kind: input, shape index: {}]
  %s2 = inlined_call_operand.vmem [shape: f32[1,128], index: 2, kind: input, shape index: {}]
  %s3 = inlined_call_operand.hbm [shape: f32[128,128], index: 3, kind: input, shape index: {}]
  %s4 = inlined_call_operand.vmem [shape: f32[1,128], index: 4, kind: input, shape index: {}]
  %s5 = inlined_call_operand.hbm [shape: f32[128,128], index: 5, kind: input, shape index: {}]
  %s6 = inlined_call_operand.vmem [shape: f32[1,128], index: 6, kind: input, shape index: {}]
  %s7 = inlined_call_operand.hbm [shape: f32[8,128], index: 7, kind: output, shape index: {}]
  %s8 = sld [smem:[#allocation0]]
  $region58: #{tpu_custom_call.1} parent=0
    _
  %s10 = ssub.s32 1, %s8
  %s11 = scalar_select 0, %s10, %s8
  $region1: #{tpu_custom_call.1} parent=0
    #allocation3 [shape = 'u8[4096]{0}', space=vmem, size = 0x1000, scoped, tag = 'input window, operand 0, single buffered']
    #allocation4 [shape = 's32[1]{0}', space=sflag, size = 0x4, scoped, tag = 'scoped memory for tpu_custom_call.1']
    #allocation5 [shape = 's32[1]{0}', space=sflag, size = 0x4, scoped, tag = 'scoped memory for tpu_custom_call.1']
    #allocation6 [shape = 'u8[65536]{0}', space=vmem, size = 0x10000, scoped, tag = 'input window, operand 1, single buffered']
    #allocation7 [shape = 's32[1]{0}', space=sflag, size = 0x4, scoped, tag = 'scoped memory for tpu_custom_call.1']
    #allocation8 [shape = 'u8[65536]{0}', space=vmem, size = 0x10000, scoped, tag = 'input window, operand 3, single buffered']
    #allocation9 [shape = 'u8[65536]{0}', space=vmem, size = 0x10000, scoped, tag = 'input window, operand 5, single buffered']
    #allocation10 [shape = 's32[1]{0}', space=sflag, size = 0x4, scoped, tag = 'scoped memory for tpu_custom_call.1']
    #allocation11 [shape = 'u8[4096]{0}', space=vmem, size = 0x1000, scoped, tag = 'output window, operand 0, single buffered']
    %12 = vsyncpa [#allocation4], 0
    %13 = vsyncpa [#allocation7], 0
    %14 = vsyncpa [#allocation10], 0
    %15 = vsyncpa [#allocation5], 0
    // Predicated region
    $region2: #{tpu_custom_call.1} parent=1 // pred_check
      _
    $region3: #{tpu_custom_call.1} parent=1 // pred_check_branch
      %17 = sbr.rel (0) target = $region5
    $region4: #{tpu_custom_call.1} parent=1 // pred_region
      %19 = vsyncadd [#allocation4], 0
      %s21 = sshll.u32 %s0, 4
      %s22 = int_to_ptr.hbm [resolvable:$true] %s21
      %s23 = sshll.u32 [#allocation3], 4
      %s24 = int_to_ptr.vmem [resolvable:$true] %s23
      %26 = dma.hbm_to_vmem [thread:$0]  %s22, 128, %s24, [#allocation4]
    $region5: #{tpu_custom_call.1} parent=1 // pred_fallthru
      _
    // Predicated region
    $region6: #{tpu_custom_call.1} parent=1 // pred_check
      _
    $region7: #{tpu_custom_call.1} parent=1 // pred_check_branch
      %28 = sbr.rel (0) target = $region9
    $region8: #{tpu_custom_call.1} parent=1 // pred_region
      %30 = vsyncadd [#allocation7], 0
      %s31 = sshll.u32 %s1, 4
      %s32 = int_to_ptr.hbm [resolvable:$true] %s31
      %s33 = sshll.u32 [#allocation6], 4
      %s34 = int_to_ptr.vmem [resolvable:$true] %s33
      %39 = dma.hbm_to_vmem [thread:$0]  %s32, 2048, %s34, [#allocation7], 128, 128, 8
    $region9: #{tpu_custom_call.1} parent=1 // pred_fallthru
      _
    // Predicated region
    $region10: #{tpu_custom_call.1} parent=1 // pred_check
      _
    $region11: #{tpu_custom_call.1} parent=1 // pred_check_branch
      %41 = sbr.rel (0) target = $region13
    $region12: #{tpu_custom_call.1} parent=1 // pred_region
      _
    $region13: #{tpu_custom_call.1} parent=1 // pred_fallthru
      _
    // Predicated region
    $region14: #{tpu_custom_call.1} parent=1 // pred_check
      _
    $region15: #{tpu_custom_call.1} parent=1 // pred_check_branch
      %43 = sbr.rel (0) target = $region17
    $region16: #{tpu_custom_call.1} parent=1 // pred_region
      %45 = vsyncadd [#allocation7], 0
      %s46 = sshll.u32 %s3, 4
      %s47 = int_to_ptr.hbm [resolvable:$true] %s46
      %s48 = sshll.u32 [#allocation8], 4
      %s49 = int_to_ptr.vmem [resolvable:$true] %s48
      %54 = dma.hbm_to_vmem [thread:$0]  %s47, 2048, %s49, [#allocation7], 128, 128, 8
    $region17: #{tpu_custom_call.1} parent=1 // pred_fallthru
      _
    // Predicated region
    $region18: #{tpu_custom_call.1} parent=1 // pred_check
      _
    $region19: #{tpu_custom_call.1} parent=1 // pred_check_branch
      %56 = sbr.rel (0) target = $region21
    $region20: #{tpu_custom_call.1} parent=1 // pred_region
      _
    $region21: #{tpu_custom_call.1} parent=1 // pred_fallthru
      _
    // Predicated region
    $region22: #{tpu_custom_call.1} parent=1 // pred_check
      _
    $region23: #{tpu_custom_call.1} parent=1 // pred_check_branch
      %58 = sbr.rel (0) target = $region25
    $region24: #{tpu_custom_call.1} parent=1 // pred_region
      %60 = vsyncadd [#allocation10], 0
      %s61 = sshll.u32 %s5, 4
      %s62 = int_to_ptr.hbm [resolvable:$true] %s61
      %s63 = sshll.u32 [#allocation9], 4
      %s64 = int_to_ptr.vmem [resolvable:$true] %s63
      %69 = dma.hbm_to_vmem [thread:$0]  %s62, 2048, %s64, [#allocation10], 128, 128, 8
    $region25: #{tpu_custom_call.1} parent=1 // pred_fallthru
      _
    // Predicated region
    $region26: #{tpu_custom_call.1} parent=1 // pred_check
      _
    $region27: #{tpu_custom_call.1} parent=1 // pred_check_branch
      %71 = sbr.rel (0) target = $region29
    $region28: #{tpu_custom_call.1} parent=1 // pred_region
      _
    $region29: #{tpu_custom_call.1} parent=1 // pred_fallthru
      _
    // Predicated region
    $region30: #{tpu_custom_call.1} parent=1 // pred_check
      _
    $region31: #{tpu_custom_call.1} parent=1 // pred_check_branch
      %73 = sbr.rel (0) target = $region33
    $region32: #{tpu_custom_call.1} parent=1 // pred_region
      %75 = dma.done [#allocation4], 128
    $region33: #{tpu_custom_call.1} parent=1 // pred_fallthru
      _
    // Predicated region
    $region34: #{tpu_custom_call.1} parent=1 // pred_check
      _
    $region35: #{tpu_custom_call.1} parent=1 // pred_check_branch
      %77 = sbr.rel (0) target = $region37
    $region36: #{tpu_custom_call.1} parent=1 // pred_region
      %79 = dma.done [#allocation7], 2048
    $region37: #{tpu_custom_call.1} parent=1 // pred_fallthru
      _
    // Predicated region
    $region38: #{tpu_custom_call.1} parent=1 // pred_check
      _
    $region39: #{tpu_custom_call.1} parent=1 // pred_check_branch
      %81 = sbr.rel (0) target = $region41
    $region40: #{tpu_custom_call.1} parent=1 // pred_region
      %83 = dma.done [#allocation7], 2048
    $region41: #{tpu_custom_call.1} parent=1 // pred_fallthru
      _
    // Predicated region
    $region42: #{tpu_custom_call.1} parent=1 // pred_check
      _
    $region43: #{tpu_custom_call.1} parent=1 // pred_check_branch
      %85 = sbr.rel (0) target = $region45
    $region44: #{tpu_custom_call.1} parent=1 // pred_region
      %87 = dma.done [#allocation10], 2048
    $region45: #{tpu_custom_call.1} parent=1 // pred_fallthru
      _
    %p88 = scmp.eq.s32.totalorder 0, 0
    // Predicated region
    $region46: #{tpu_custom_call.1} parent=1 // pred_check
      %p89 = pneg %p88
    $region47: #{tpu_custom_call.1} parent=1 // pred_check_branch
      %91 = sbr.rel (%p89) target = $region49
    $region48: #{tpu_custom_call.1} parent=1 // pred_region
      %v92 = vld [vmem:[#allocation3] sm:$0xff]
      %v93 = vld [vmem:[#allocation6] sm:$0xff]
      %v94 = vld [vmem:[#allocation6 + $0x8] sm:$0xff]
      %v95 = vld [vmem:[#allocation6 + $0x10] sm:$0xff]
      %v96 = vld [vmem:[#allocation6 + $0x18] sm:$0xff]
      %v97 = vld [vmem:[#allocation6 + $0x20] sm:$0xff]
      %v98 = vld [vmem:[#allocation6 + $0x28] sm:$0xff]
      %v99 = vld [vmem:[#allocation6 + $0x30] sm:$0xff]
      %v100 = vld [vmem:[#allocation6 + $0x38] sm:$0xff]
      %v101 = vld [vmem:[#allocation6 + $0x40] sm:$0xff]
      %v102 = vld [vmem:[#allocation6 + $0x48] sm:$0xff]
      %v103 = vld [vmem:[#allocation6 + $0x50] sm:$0xff]
      %v104 = vld [vmem:[#allocation6 + $0x58] sm:$0xff]
      %v105 = vld [vmem:[#allocation6 + $0x60] sm:$0xff]
      %v106 = vld [vmem:[#allocation6 + $0x68] sm:$0xff]
      %v107 = vld [vmem:[#allocation6 + $0x70] sm:$0xff]
      %v108 = vld [vmem:[#allocation6 + $0x78] sm:$0xff]
      %v109 = vld [vmem:[%s2] sm:$0x1]
      %v111 = vperm.slane %v109, 0
      %113 = vmatpush.msra.mxu0 %v108
      %114 = vmatpush.msra.mxu0 %v107
      %115 = vmatpush.msra.mxu0 %v106
      %116 = vmatpush.msra.mxu0 %v105
      %117 = vmatpush.msra.mxu0 %v104
      %118 = vmatpush.msra.mxu0 %v103
      %119 = vmatpush.msra.mxu0 %v102
      %120 = vmatpush.msra.mxu0 %v101
      %121 = vmatpush.msra.mxu0 %v100
      %122 = vmatpush.msra.mxu0 %v99
      %123 = vmatpush.msra.mxu0 %v98
      %124 = vmatpush.msra.mxu0 %v97
      %125 = vmatpush.msra.mxu0 %v96
      %126 = vmatpush.msra.mxu0 %v95
      %127 = vmatpush.msra.mxu0 %v94
      %128 = vmatpush.msra.mxu0 %v93
      %129 = vmatmul.f32.gmra.mxu0 %v92
      %v130 = vpop.f32.mrf.mxu0
      %v131 = vadd.f32 %v111, %v130
      %132 = vdwg.mxu0
      %v133 = vmax.f32 %v131, 0.0
      %v134 = vld [vmem:[#allocation8] sm:$0xff]
      %v135 = vld [vmem:[#allocation8 + $0x8] sm:$0xff]
      %v136 = vld [vmem:[#allocation8 + $0x10] sm:$0xff]
      %v137 = vld [vmem:[#allocation8 + $0x18] sm:$0xff]
      %v138 = vld [vmem:[#allocation8 + $0x20] sm:$0xff]
      %v139 = vld [vmem:[#allocation8 + $0x28] sm:$0xff]
      %v140 = vld [vmem:[#allocation8 + $0x30] sm:$0xff]
      %v141 = vld [vmem:[#allocation8 + $0x38] sm:$0xff]
      %v142 = vld [vmem:[#allocation8 + $0x40] sm:$0xff]
      %v143 = vld [vmem:[#allocation8 + $0x48] sm:$0xff]
      %v144 = vld [vmem:[#allocation8 + $0x50] sm:$0xff]
      %v145 = vld [vmem:[#allocation8 + $0x58] sm:$0xff]
      %v146 = vld [vmem:[#allocation8 + $0x60] sm:$0xff]
      %v147 = vld [vmem:[#allocation8 + $0x68] sm:$0xff]
      %v148 = vld [vmem:[#allocation8 + $0x70] sm:$0xff]
      %v149 = vld [vmem:[#allocation8 + $0x78] sm:$0xff]
      %v150 = vld [vmem:[%s4] sm:$0x1]
      %v152 = vperm.slane %v150, 0
      %154 = vmatpush.msra.mxu0 %v149
      %155 = vmatpush.msra.mxu0 %v148
      %156 = vmatpush.msra.mxu0 %v147
      %157 = vmatpush.msra.mxu0 %v146
      %158 = vmatpush.msra.mxu0 %v145
      %159 = vmatpush.msra.mxu0 %v144
      %160 = vmatpush.msra.mxu0 %v143
      %161 = vmatpush.msra.mxu0 %v142
      %162 = vmatpush.msra.mxu0 %v141
      %163 = vmatpush.msra.mxu0 %v140
      %164 = vmatpush.msra.mxu0 %v139
      %165 = vmatpush.msra.mxu0 %v138
      %166 = vmatpush.msra.mxu0 %v137
      %167 = vmatpush.msra.mxu0 %v136
      %168 = vmatpush.msra.mxu0 %v135
      %169 = vmatpush.msra.mxu0 %v134
      %170 = vmatmul.f32.gmra.mxu0 %v133
      %v171 = vpop.f32.mrf.mxu0
      %v172 = vadd.f32 %v152, %v171
      %173 = vdwg.mxu0
      %v174 = vadd.f32 %v172, %v92
      %175 = vst [vmem:[#allocation2] sm:$0xff] %v174
    $region49: #{tpu_custom_call.1} parent=1 // pred_fallthru
      _
    %v176 = vld [vmem:[#allocation2] sm:$0xff]
    %v177 = vld [vmem:[#allocation9] sm:$0xff]
    %v178 = vld [vmem:[#allocation9 + $0x8] sm:$0xff]
    %v179 = vld [vmem:[#allocation9 + $0x10] sm:$0xff]
    %v180 = vld [vmem:[#allocation9 + $0x18] sm:$0xff]
    %v181 = vld [vmem:[#allocation9 + $0x20] sm:$0xff]
    %v182 = vld [vmem:[#allocation9 + $0x28] sm:$0xff]
    %v183 = vld [vmem:[#allocation9 + $0x30] sm:$0xff]
    %v184 = vld [vmem:[#allocation9 + $0x38] sm:$0xff]
    %v185 = vld [vmem:[#allocation9 + $0x40] sm:$0xff]
    %v186 = vld [vmem:[#allocation9 + $0x48] sm:$0xff]
    %v187 = vld [vmem:[#allocation9 + $0x50] sm:$0xff]
    %v188 = vld [vmem:[#allocation9 + $0x58] sm:$0xff]
    %v189 = vld [vmem:[#allocation9 + $0x60] sm:$0xff]
    %v190 = vld [vmem:[#allocation9 + $0x68] sm:$0xff]
    %v191 = vld [vmem:[#allocation9 + $0x70] sm:$0xff]
    %v192 = vld [vmem:[#allocation9 + $0x78] sm:$0xff]
    %v193 = vld [vmem:[%s6] sm:$0x1]
    %v195 = vperm.slane %v193, 0
    %197 = vmatpush.msra.mxu0 %v192
    %198 = vmatpush.msra.mxu0 %v191
    %199 = vmatpush.msra.mxu0 %v190
    %200 = vmatpush.msra.mxu0 %v189
    %201 = vmatpush.msra.mxu0 %v188
    %202 = vmatpush.msra.mxu0 %v187
    %203 = vmatpush.msra.mxu0 %v186
    %204 = vmatpush.msra.mxu0 %v185
    %205 = vmatpush.msra.mxu0 %v184
    %206 = vmatpush.msra.mxu0 %v183
    %207 = vmatpush.msra.mxu0 %v182
    %208 = vmatpush.msra.mxu0 %v181
    %209 = vmatpush.msra.mxu0 %v180
    %210 = vmatpush.msra.mxu0 %v179
    %211 = vmatpush.msra.mxu0 %v178
    %212 = vmatpush.msra.mxu0 %v177
    %213 = vmatmul.f32.gmra.mxu0 %v176
    %v214 = vpop.f32.mrf.mxu0
    %v215 = vadd.f32 %v195, %v214
    %216 = vdwg.mxu0
    %217 = vst [vmem:[#allocation11] sm:$0xff] %v215
    // Predicated region
    $region50: #{tpu_custom_call.1} parent=1 // pred_check
      _
    $region51: #{tpu_custom_call.1} parent=1 // pred_check_branch
      %219 = sbr.rel (0) target = $region53
    $region52: #{tpu_custom_call.1} parent=1 // pred_region
      %221 = vsyncadd [#allocation5], 0
      %s223 = sshll.u32 [#allocation11], 4
      %s224 = int_to_ptr.vmem [resolvable:$true] %s223
      %s225 = sshll.u32 %s7, 4
      %s226 = int_to_ptr.hbm [resolvable:$true] %s225
      %228 = dma.vmem_to_hbm [thread:$0]  %s224, 128, %s226, [#allocation5]
    $region53: #{tpu_custom_call.1} parent=1 // pred_fallthru
      _
    // Predicated region
    $region54: #{tpu_custom_call.1} parent=1 // pred_check
      _
    $region55: #{tpu_custom_call.1} parent=1 // pred_check_branch
      %230 = sbr.rel (0) target = $region57
    $region56: #{tpu_custom_call.1} parent=1 // pred_region
      %232 = dma.done [#allocation5], 128
    $region57: #{tpu_custom_call.1} parent=1 // pred_fallthru
      _
    %233 = vsyncpa [#allocation4], 1
    %234 = vsyncpa [#allocation7], 1
    %235 = vsyncpa [#allocation10], 1
    %236 = vsyncpa [#allocation5], 1

</llo_original>
